<compile_context>
chip_gen: v7x
topology: tpu7x:2x2x1
jax: 0.10.0
libtpu: 0.0.40
codegen_flags: <defaults>
</compile_context>

<pallas_src>
import jax
import jax.numpy as jnp
from jax import lax
from jax.experimental import pallas as pl
from jax.experimental.pallas import tpu as pltpu

# --- stand-in for cfg ---
RNN_TYPE = "LSTM"      # cfg.RNN_TYPE
INPUT_DIM = 16         # cfg.input_dim
NINPUT = 32            # ninput (embedding dim fed to the LSTM)
NHIDDEN = 32           # nhidden
NLAYERS = 1
BIDIRECTIONAL = False
NUM_DIRECTIONS = 2 if BIDIRECTIONAL else 1
H = NHIDDEN // NUM_DIRECTIONS


def _num_tensorcores() -> int:
    """Best-effort TC count: split the batch over the grid only on multi-TC chips (v7x)."""
    try:
        kind = jax.devices()[0].device_kind.lower()
    except Exception:
        return 1
    return 2 if "v7" in kind else 1


def rnn_encoder_kernel(cap_ref, wf_ref, bf_ref, whh_ref, h0_ref, c0_ref,
                       out_ref, sent_ref):
    T, Bb, Din = cap_ref.shape
    Hh = h0_ref.shape[-1]

    # ---- fused encoder-Linear + LSTM input-gate matmul for ALL timesteps ----
    # bf16 MXU operands, f32 accumulation; encoder + LSTM biases already folded into bf_ref.
    cap = cap_ref[...].reshape(T * Bb, Din).astype(jnp.bfloat16)            # (T*Bb, Din)
    xg = jnp.dot(cap, wf_ref[...],
                 preferred_element_type=jnp.float32) + bf_ref[...]          # (T*Bb, 4H) f32

    # Recurrent weight: bf16, loaded once, resident for the whole loop.
    whh = whh_ref[...]                                                      # (H, 4H) bf16

    # Hoisted lane mask; gate order is (i, f, o, g) so only the last H lanes are tanh.
    lane = lax.broadcasted_iota(jnp.int32, (Bb, 4 * Hh), 1)
    g_mask = lane >= 3 * Hh

    # ---- recurrence: h, c live as values (vreg-resident); loop fully unrolled ----
    h = h0_ref[...]                                                         # (Bb, H) f32
    c = c0_ref[...]                                                         # (Bb, H) f32
    hs = []
    for t in range(T):
        gates = xg[t * Bb:(t + 1) * Bb, :] + jnp.dot(
            h.astype(jnp.bfloat16), whh, preferred_element_type=jnp.float32)  # (Bb, 4H)
        # Full-vreg EUP nonlinearities, combined with a lane mask (no pre-slice relayout).
        act = jnp.where(g_mask, jnp.tanh(gates), jax.nn.sigmoid(gates))     # [σi|σf|σo|tg]
        i_g = act[:, :Hh]
        f_g = act[:, Hh:2 * Hh]
        o_g = act[:, 2 * Hh:3 * Hh]
        g_g = act[:, 3 * Hh:]
        c = f_g * c + i_g * g_g
        h = o_g * jnp.tanh(c)
        hs.append(h)

    # Single lane-dense store: row b = [h_0(b,:), h_1(b,:), ..., h_{T-1}(b,:)].
    out_ref[...] = jnp.concatenate(hs, axis=-1).astype(out_ref.dtype)       # (Bb, T*H)
    sent_ref[...] = h.astype(sent_ref.dtype)                                # (Bb, H)


def _reorder_ifgo_to_ifog(m):
    # PyTorch LSTM gate order along the 4H axis is (i, f, g, o); move to (i, f, o, g).
    i, f, g, o = jnp.split(m, 4, axis=-1)
    return jnp.concatenate([i, f, o, g], axis=-1)


def rnn_encoder_forward(captions, params, hidden):
    """Mirrors RNN_ENCODER.forward(captions, hidden) for LSTM / nlayers=1 / unidirectional."""
    assert RNN_TYPE == "LSTM" and NLAYERS == 1 and not BIDIRECTIONAL
    h0, c0 = hidden                        # each (nlayers*num_directions, B, H)
    B, T, Din = captions.shape

    # PyTorch stores Linear/LSTM weights as (out, in); kernel consumes (in, out).
    w_enc = params["w_enc"].T              # (Din, E)
    b_enc = params["b_enc"]                # (E,)
    w_ih = params["w_ih"].T                # (E, 4H)
    w_hh = params["w_hh"].T                # (H, 4H)
    b_ih = params["b_ih"]                  # (4H,)
    b_hh = params["b_hh"]                  # (4H,)

    # Fuse encoder Linear into the input-gate matmul (dropout p = 0 => exact).
    w_fused = _reorder_ifgo_to_ifog(w_enc @ w_ih)                              # (Din, 4H)
    b_fused = _reorder_ifgo_to_ifog((b_enc @ w_ih + b_ih + b_hh)
                                    .reshape(1, 4 * H))                        # (1, 4H) f32
    w_fused_bf = w_fused.astype(jnp.bfloat16)                                  # bf16 MXU operand
    w_hh_bf = _reorder_ifgo_to_ifog(w_hh).astype(jnp.bfloat16)                 # bf16 recurrent W

    # Time-major captions so per-step xg rows are a contiguous static sublane slice.
    cap_tm = jnp.transpose(captions, (1, 0, 2))                                # (T, B, Din)
    h0_2d = h0[0]                                                              # (B, H)
    c0_2d = c0[0]                                                              # (B, H)

    # Batch split only on multi-TC chips (v7x). On v5e/v6e the grid is a sequential loop on
    # one TC, so nb=2 would just run the serial recurrence twice. B % 16 == 0 keeps Bb a
    # multiple of 8 (sublane alignment); otherwise fall back to nb=1 (correct everywhere).
    nb = 2 if (_num_tensorcores() >= 2 and B % 16 == 0) else 1
    Bb = B // nb

    out_packed, sent = pl.pallas_call(
        rnn_encoder_kernel,
        out_shape=(jax.ShapeDtypeStruct((B, T * H), jnp.float32),
                   jax.ShapeDtypeStruct((B, H), jnp.float32)),
        grid=(nb,),
        in_specs=[
            pl.BlockSpec((T, Bb, Din), lambda i: (0, i, 0)),     # captions (time-major)
            pl.BlockSpec((Din, 4 * H), lambda i: (0, 0)),        # fused input-gate weight
            pl.BlockSpec((1, 4 * H), lambda i: (0, 0)),          # fused bias
            pl.BlockSpec((H, 4 * H), lambda i: (0, 0)),          # recurrent weight (bf16)
            pl.BlockSpec((Bb, H), lambda i: (i, 0)),             # h0
            pl.BlockSpec((Bb, H), lambda i: (i, 0)),             # c0
        ],
        out_specs=(pl.BlockSpec((Bb, T * H), lambda i: (i, 0)),  # lane-dense packed hiddens
                   pl.BlockSpec((Bb, H), lambda i: (i, 0))),     # final hidden
        compiler_params=pltpu.CompilerParams(
            dimension_semantics=("parallel",)),
    )(cap_tm, w_fused_bf, b_fused, w_hh_bf, h0_2d, c0_2d)

    # Unpack once in the wrapper: (B, T*H) -> (B, T, H) -> (B, H, T) = output.transpose(1,2).
    words_emb = jnp.transpose(out_packed.reshape(B, T, H), (0, 2, 1))
    sent_emb = sent.reshape(-1, H * NUM_DIRECTIONS)              # (B, H)
    return words_emb, sent_emb


def reference_forward(captions, params, hidden):
    """Pure-JAX reference with the same bf16 matmul operands / f32 accumulation,
    original (i,f,g,o) gate order and unfused per-gate nonlinearities."""
    h0, c0 = hidden
    B, T, Din = captions.shape
    w_enc = params["w_enc"].T
    w_ih = params["w_ih"].T
    w_hh = params["w_hh"].T
    b_fused = params["b_enc"] @ w_ih + params["b_ih"] + params["b_hh"]
    w_fused = (w_enc @ w_ih).astype(jnp.bfloat16)
    w_hh_bf = w_hh.astype(jnp.bfloat16)
    cap = captions.astype(jnp.bfloat16)
    xg = jnp.einsum("btd,dg->btg", cap, w_fused,
                    preferred_element_type=jnp.float32) + b_fused           # (B, T, 4H)
    h, c = h0[0], c0[0]
    outs = []
    for t in range(T):
        gates = xg[:, t, :] + jnp.dot(h.astype(jnp.bfloat16), w_hh_bf,
                                      preferred_element_type=jnp.float32)
        i_g = jax.nn.sigmoid(gates[:, 0 * H:1 * H])
        f_g = jax.nn.sigmoid(gates[:, 1 * H:2 * H])
        g_g = jnp.tanh(gates[:, 2 * H:3 * H])
        o_g = jax.nn.sigmoid(gates[:, 3 * H:4 * H])
        c = f_g * c + i_g * g_g
        h = o_g * jnp.tanh(c)
        outs.append(h)
    out = jnp.stack(outs, axis=1)                                           # (B, T, H)
    return jnp.transpose(out, (0, 2, 1)), h


def init_params(key):
    k1, k2, k3, k4, k5, k6 = jax.random.split(key, 6)
    initrange = 0.1                                   # init_weights(): encoder uniform(-0.1, 0.1)
    stdv = 1.0 / jnp.sqrt(H)                          # PyTorch LSTM default init range
    return {
        "w_enc": jax.random.uniform(k1, (NINPUT, INPUT_DIM), jnp.float32, -initrange, initrange),
        "b_enc": jax.random.uniform(k2, (NINPUT,), jnp.float32, -initrange, initrange),
        "w_ih": jax.random.uniform(k3, (4 * H, NINPUT), jnp.float32, -stdv, stdv),
        "b_ih": jax.random.uniform(k4, (4 * H,), jnp.float32, -stdv, stdv),
        "w_hh": jax.random.uniform(k5, (4 * H, H), jnp.float32, -stdv, stdv),
        "b_hh": jax.random.uniform(k6, (4 * H,), jnp.float32, -stdv, stdv),
    }


def init_hidden(bsz):
    # matches RNN_ENCODER.init_hidden for LSTM
    shape = (NLAYERS * NUM_DIRECTIONS, bsz, H)
    return (jnp.zeros(shape, jnp.float32), jnp.zeros(shape, jnp.float32))


if __name__ == "__main__":
    key = jax.random.PRNGKey(0)
    kp, kx = jax.random.split(key)

    B, T = 16, 8
    params = init_params(kp)
    captions = jax.random.normal(kx, (B, T, INPUT_DIM), jnp.float32)
    hidden = init_hidden(B)

    words_emb, sent_emb = jax.jit(rnn_encoder_forward)(captions, params, hidden)
    jax.block_until_ready((words_emb, sent_emb))

    assert words_emb.shape == (B, H, T), words_emb.shape
    assert sent_emb.shape == (B, H * NUM_DIRECTIONS), sent_emb.shape
    assert bool(jnp.all(jnp.isfinite(words_emb))) and bool(jnp.all(jnp.isfinite(sent_emb)))

    ref_words, ref_sent = reference_forward(captions, params, hidden)
    assert jnp.allclose(words_emb, ref_words, atol=2e-3, rtol=2e-3)
    assert jnp.allclose(sent_emb, ref_sent, atol=2e-3, rtol=2e-3)

    print("KERNEL_OK")
</pallas_src>

<mosaic_0001>
module attributes {stable_mosaic.version = 11 : i64} {
  func.func @rnn_encoder_kernel(%arg0: i32, %arg1: memref<8x16x16xf32, #tpu.memory_space<vmem>>, %arg2: memref<16x128xbf16, #tpu.memory_space<vmem>>, %arg3: memref<1x128xf32, #tpu.memory_space<vmem>>, %arg4: memref<32x128xbf16, #tpu.memory_space<vmem>>, %arg5: memref<16x32xf32, #tpu.memory_space<vmem>>, %arg6: memref<16x32xf32, #tpu.memory_space<vmem>>, %arg7: memref<16x256xf32, #tpu.memory_space<vmem>>, %arg8: memref<16x32xf32, #tpu.memory_space<vmem>>) attributes {dimension_semantics = [#tpu.dimension_semantics<parallel>], iteration_bounds = array<i64: 1>, scalar_prefetch = 0 : i64, scratch_operands = 0 : i64, tpu.core_type = #tpu.core_type<tc>, window_params = [{transform_indices = @transform_0, window_bounds = array<i64: 8, 16, 16>}, {pipeline_mode = #tpu.pipeline_mode<synchronous>, transform_indices = @transform_1, window_bounds = array<i64: 16, 128>}, {pipeline_mode = #tpu.pipeline_mode<synchronous>, transform_indices = @transform_2, window_bounds = array<i64: 1, 128>}, {pipeline_mode = #tpu.pipeline_mode<synchronous>, transform_indices = @transform_3, window_bounds = array<i64: 32, 128>}, {transform_indices = @transform_4, window_bounds = array<i64: 16, 32>}, {transform_indices = @transform_5, window_bounds = array<i64: 16, 32>}, {transform_indices = @transform_6, window_bounds = array<i64: 16, 256>}, {transform_indices = @transform_7, window_bounds = array<i64: 16, 32>}]} {
    %c0 = arith.constant 0 : index
    %c0_0 = arith.constant 0 : index
    %c0_1 = arith.constant 0 : index
    %0 = vector.load %arg1[%c0, %c0_0, %c0_1] : memref<8x16x16xf32, #tpu.memory_space<vmem>>, vector<8x16x16xf32>
    %1 = vector.shape_cast %0 : vector<8x16x16xf32> to vector<128x16xf32>
    %2 = arith.truncf %1 : vector<128x16xf32> to vector<128x16xbf16>
    %c0_2 = arith.constant 0 : index
    %c0_3 = arith.constant 0 : index
    %3 = vector.load %arg2[%c0_2, %c0_3] : memref<16x128xbf16, #tpu.memory_space<vmem>>, vector<16x128xbf16>
    %cst = arith.constant dense<0.000000e+00> : vector<128x128xf32>
    %4 = tpu.matmul %2, %3, %cst {dimension_numbers = #tpu.dot_dimension_numbers<[1], [0], [0], [1], [0, 0, 1, 1], [], []>} : vector<128x16xbf16>, vector<16x128xbf16>, vector<128x128xf32> -> vector<128x128xf32>
    %c0_4 = arith.constant 0 : index
    %c0_5 = arith.constant 0 : index
    %5 = vector.load %arg3[%c0_4, %c0_5] : memref<1x128xf32, #tpu.memory_space<vmem>>, vector<1x128xf32>
    %6 = vector.broadcast %5 : vector<1x128xf32> to vector<128x128xf32>
    %7 = arith.addf %4, %6 : vector<128x128xf32>
    %c0_6 = arith.constant 0 : index
    %c0_7 = arith.constant 0 : index
    %8 = vector.load %arg4[%c0_6, %c0_7] : memref<32x128xbf16, #tpu.memory_space<vmem>>, vector<32x128xbf16>
    %9 = tpu.iota {dimensions = array<i32: 1>} : vector<16x128xi32>
    %c96_i32 = arith.constant 96 : i32
    %10 = vector.broadcast %c96_i32 : i32 to vector<16x128xi32>
    %11 = arith.cmpi sge, %9, %10 : vector<16x128xi32>
    %c0_8 = arith.constant 0 : index
    %c0_9 = arith.constant 0 : index
    %12 = vector.load %arg5[%c0_8, %c0_9] : memref<16x32xf32, #tpu.memory_space<vmem>>, vector<16x32xf32>
    %c0_10 = arith.constant 0 : index
    %c0_11 = arith.constant 0 : index
    %13 = vector.load %arg6[%c0_10, %c0_11] : memref<16x32xf32, #tpu.memory_space<vmem>>, vector<16x32xf32>
    %14 = vector.extract_strided_slice %7 {offsets = [0, 0], sizes = [16, 128], strides = [1, 1]} : vector<128x128xf32> to vector<16x128xf32>
    %15 = arith.truncf %12 : vector<16x32xf32> to vector<16x32xbf16>
    %cst_12 = arith.constant dense<0.000000e+00> : vector<16x128xf32>
    %16 = tpu.matmul %15, %8, %cst_12 {dimension_numbers = #tpu.dot_dimension_numbers<[1], [0], [0], [1], [0, 0, 1, 1], [], []>} : vector<16x32xbf16>, vector<32x128xbf16>, vector<16x128xf32> -> vector<16x128xf32>
    %17 = arith.addf %14, %16 : vector<16x128xf32>
    %18 = math.tanh %17 : vector<16x128xf32>
    %19 = arith.negf %17 : vector<16x128xf32>
    %20 = math.exp %19 : vector<16x128xf32>
    %cst_13 = arith.constant 1.000000e+00 : f32
    %21 = vector.broadcast %cst_13 : f32 to vector<16x128xf32>
    %22 = arith.addf %21, %20 : vector<16x128xf32>
    %23 = arith.divf %21, %22 : vector<16x128xf32>
    %24 = arith.select %11, %18, %23 : vector<16x128xi1>, vector<16x128xf32>
    %25 = vector.extract_strided_slice %24 {offsets = [0, 0], sizes = [16, 32], strides = [1, 1]} : vector<16x128xf32> to vector<16x32xf32>
    %26 = vector.extract_strided_slice %24 {offsets = [0, 32], sizes = [16, 32], strides = [1, 1]} : vector<16x128xf32> to vector<16x32xf32>
    %27 = vector.extract_strided_slice %24 {offsets = [0, 64], sizes = [16, 32], strides = [1, 1]} : vector<16x128xf32> to vector<16x32xf32>
    %28 = vector.extract_strided_slice %24 {offsets = [0, 96], sizes = [16, 32], strides = [1, 1]} : vector<16x128xf32> to vector<16x32xf32>
    %29 = arith.mulf %26, %13 : vector<16x32xf32>
    %30 = arith.mulf %25, %28 : vector<16x32xf32>
    %31 = arith.addf %29, %30 : vector<16x32xf32>
    %32 = math.tanh %31 : vector<16x32xf32>
    %33 = arith.mulf %27, %32 : vector<16x32xf32>
    %34 = vector.extract_strided_slice %7 {offsets = [16, 0], sizes = [16, 128], strides = [1, 1]} : vector<128x128xf32> to vector<16x128xf32>
    %35 = arith.truncf %33 : vector<16x32xf32> to vector<16x32xbf16>
    %cst_14 = arith.constant dense<0.000000e+00> : vector<16x128xf32>
    %36 = tpu.matmul %35, %8, %cst_14 {dimension_numbers = #tpu.dot_dimension_numbers<[1], [0], [0], [1], [0, 0, 1, 1], [], []>} : vector<16x32xbf16>, vector<32x128xbf16>, vector<16x128xf32> -> vector<16x128xf32>
    %37 = arith.addf %34, %36 : vector<16x128xf32>
    %38 = math.tanh %37 : vector<16x128xf32>
    %39 = arith.negf %37 : vector<16x128xf32>
    %40 = math.exp %39 : vector<16x128xf32>
    %cst_15 = arith.constant 1.000000e+00 : f32
    %41 = vector.broadcast %cst_15 : f32 to vector<16x128xf32>
    %42 = arith.addf %41, %40 : vector<16x128xf32>
    %43 = arith.divf %41, %42 : vector<16x128xf32>
    %44 = arith.select %11, %38, %43 : vector<16x128xi1>, vector<16x128xf32>
    %45 = vector.extract_strided_slice %44 {offsets = [0, 0], sizes = [16, 32], strides = [1, 1]} : vector<16x128xf32> to vector<16x32xf32>
    %46 = vector.extract_strided_slice %44 {offsets = [0, 32], sizes = [16, 32], strides = [1, 1]} : vector<16x128xf32> to vector<16x32xf32>
    %47 = vector.extract_strided_slice %44 {offsets = [0, 64], sizes = [16, 32], strides = [1, 1]} : vector<16x128xf32> to vector<16x32xf32>
    %48 = vector.extract_strided_slice %44 {offsets = [0, 96], sizes = [16, 32], strides = [1, 1]} : vector<16x128xf32> to vector<16x32xf32>
    %49 = arith.mulf %46, %31 : vector<16x32xf32>
    %50 = arith.mulf %45, %48 : vector<16x32xf32>
    %51 = arith.addf %49, %50 : vector<16x32xf32>
    %52 = math.tanh %51 : vector<16x32xf32>
    %53 = arith.mulf %47, %52 : vector<16x32xf32>
    %54 = vector.extract_strided_slice %7 {offsets = [32, 0], sizes = [16, 128], strides = [1, 1]} : vector<128x128xf32> to vector<16x128xf32>
    %55 = arith.truncf %53 : vector<16x32xf32> to vector<16x32xbf16>
    %cst_16 = arith.constant dense<0.000000e+00> : vector<16x128xf32>
    %56 = tpu.matmul %55, %8, %cst_16 {dimension_numbers = #tpu.dot_dimension_numbers<[1], [0], [0], [1], [0, 0, 1, 1], [], []>} : vector<16x32xbf16>, vector<32x128xbf16>, vector<16x128xf32> -> vector<16x128xf32>
    %57 = arith.addf %54, %56 : vector<16x128xf32>
    %58 = math.tanh %57 : vector<16x128xf32>
    %59 = arith.negf %57 : vector<16x128xf32>
    %60 = math.exp %59 : vector<16x128xf32>
    %cst_17 = arith.constant 1.000000e+00 : f32
    %61 = vector.broadcast %cst_17 : f32 to vector<16x128xf32>
    %62 = arith.addf %61, %60 : vector<16x128xf32>
    %63 = arith.divf %61, %62 : vector<16x128xf32>
    %64 = arith.select %11, %58, %63 : vector<16x128xi1>, vector<16x128xf32>
    %65 = vector.extract_strided_slice %64 {offsets = [0, 0], sizes = [16, 32], strides = [1, 1]} : vector<16x128xf32> to vector<16x32xf32>
    %66 = vector.extract_strided_slice %64 {offsets = [0, 32], sizes = [16, 32], strides = [1, 1]} : vector<16x128xf32> to vector<16x32xf32>
    %67 = vector.extract_strided_slice %64 {offsets = [0, 64], sizes = [16, 32], strides = [1, 1]} : vector<16x128xf32> to vector<16x32xf32>
    %68 = vector.extract_strided_slice %64 {offsets = [0, 96], sizes = [16, 32], strides = [1, 1]} : vector<16x128xf32> to vector<16x32xf32>
    %69 = arith.mulf %66, %51 : vector<16x32xf32>
    %70 = arith.mulf %65, %68 : vector<16x32xf32>
    %71 = arith.addf %69, %70 : vector<16x32xf32>
    %72 = math.tanh %71 : vector<16x32xf32>
    %73 = arith.mulf %67, %72 : vector<16x32xf32>
    %74 = vector.extract_strided_slice %7 {offsets = [48, 0], sizes = [16, 128], strides = [1, 1]} : vector<128x128xf32> to vector<16x128xf32>
    %75 = arith.truncf %73 : vector<16x32xf32> to vector<16x32xbf16>
    %cst_18 = arith.constant dense<0.000000e+00> : vector<16x128xf32>
    %76 = tpu.matmul %75, %8, %cst_18 {dimension_numbers = #tpu.dot_dimension_numbers<[1], [0], [0], [1], [0, 0, 1, 1], [], []>} : vector<16x32xbf16>, vector<32x128xbf16>, vector<16x128xf32> -> vector<16x128xf32>
    %77 = arith.addf %74, %76 : vector<16x128xf32>
    %78 = math.tanh %77 : vector<16x128xf32>
    %79 = arith.negf %77 : vector<16x128xf32>
    %80 = math.exp %79 : vector<16x128xf32>
    %cst_19 = arith.constant 1.000000e+00 : f32
    %81 = vector.broadcast %cst_19 : f32 to vector<16x128xf32>
    %82 = arith.addf %81, %80 : vector<16x128xf32>
    %83 = arith.divf %81, %82 : vector<16x128xf32>
    %84 = arith.select %11, %78, %83 : vector<16x128xi1>, vector<16x128xf32>
    %85 = vector.extract_strided_slice %84 {offsets = [0, 0], sizes = [16, 32], strides = [1, 1]} : vector<16x128xf32> to vector<16x32xf32>
    %86 = vector.extract_strided_slice %84 {offsets = [0, 32], sizes = [16, 32], strides = [1, 1]} : vector<16x128xf32> to vector<16x32xf32>
    %87 = vector.extract_strided_slice %84 {offsets = [0, 64], sizes = [16, 32], strides = [1, 1]} : vector<16x128xf32> to vector<16x32xf32>
    %88 = vector.extract_strided_slice %84 {offsets = [0, 96], sizes = [16, 32], strides = [1, 1]} : vector<16x128xf32> to vector<16x32xf32>
    %89 = arith.mulf %86, %71 : vector<16x32xf32>
    %90 = arith.mulf %85, %88 : vector<16x32xf32>
    %91 = arith.addf %89, %90 : vector<16x32xf32>
    %92 = math.tanh %91 : vector<16x32xf32>
    %93 = arith.mulf %87, %92 : vector<16x32xf32>
    %94 = vector.extract_strided_slice %7 {offsets = [64, 0], sizes = [16, 128], strides = [1, 1]} : vector<128x128xf32> to vector<16x128xf32>
    %95 = arith.truncf %93 : vector<16x32xf32> to vector<16x32xbf16>
    %cst_20 = arith.constant dense<0.000000e+00> : vector<16x128xf32>
    %96 = tpu.matmul %95, %8, %cst_20 {dimension_numbers = #tpu.dot_dimension_numbers<[1], [0], [0], [1], [0, 0, 1, 1], [], []>} : vector<16x32xbf16>, vector<32x128xbf16>, vector<16x128xf32> -> vector<16x128xf32>
    %97 = arith.addf %94, %96 : vector<16x128xf32>
    %98 = math.tanh %97 : vector<16x128xf32>
    %99 = arith.negf %97 : vector<16x128xf32>
    %100 = math.exp %99 : vector<16x128xf32>
    %cst_21 = arith.constant 1.000000e+00 : f32
    %101 = vector.broadcast %cst_21 : f32 to vector<16x128xf32>
    %102 = arith.addf %101, %100 : vector<16x128xf32>
    %103 = arith.divf %101, %102 : vector<16x128xf32>
    %104 = arith.select %11, %98, %103 : vector<16x128xi1>, vector<16x128xf32>
    %105 = vector.extract_strided_slice %104 {offsets = [0, 0], sizes = [16, 32], strides = [1, 1]} : vector<16x128xf32> to vector<16x32xf32>
    %106 = vector.extract_strided_slice %104 {offsets = [0, 32], sizes = [16, 32], strides = [1, 1]} : vector<16x128xf32> to vector<16x32xf32>
    %107 = vector.extract_strided_slice %104 {offsets = [0, 64], sizes = [16, 32], strides = [1, 1]} : vector<16x128xf32> to vector<16x32xf32>
    %108 = vector.extract_strided_slice %104 {offsets = [0, 96], sizes = [16, 32], strides = [1, 1]} : vector<16x128xf32> to vector<16x32xf32>
    %109 = arith.mulf %106, %91 : vector<16x32xf32>
    %110 = arith.mulf %105, %108 : vector<16x32xf32>
    %111 = arith.addf %109, %110 : vector<16x32xf32>
    %112 = math.tanh %111 : vector<16x32xf32>
    %113 = arith.mulf %107, %112 : vector<16x32xf32>
    %114 = vector.extract_strided_slice %7 {offsets = [80, 0], sizes = [16, 128], strides = [1, 1]} : vector<128x128xf32> to vector<16x128xf32>
    %115 = arith.truncf %113 : vector<16x32xf32> to vector<16x32xbf16>
    %cst_22 = arith.constant dense<0.000000e+00> : vector<16x128xf32>
    %116 = tpu.matmul %115, %8, %cst_22 {dimension_numbers = #tpu.dot_dimension_numbers<[1], [0], [0], [1], [0, 0, 1, 1], [], []>} : vector<16x32xbf16>, vector<32x128xbf16>, vector<16x128xf32> -> vector<16x128xf32>
    %117 = arith.addf %114, %116 : vector<16x128xf32>
    %118 = math.tanh %117 : vector<16x128xf32>
    %119 = arith.negf %117 : vector<16x128xf32>
    %120 = math.exp %119 : vector<16x128xf32>
    %cst_23 = arith.constant 1.000000e+00 : f32
    %121 = vector.broadcast %cst_23 : f32 to vector<16x128xf32>
    %122 = arith.addf %121, %120 : vector<16x128xf32>
    %123 = arith.divf %121, %122 : vector<16x128xf32>
    %124 = arith.select %11, %118, %123 : vector<16x128xi1>, vector<16x128xf32>
    %125 = vector.extract_strided_slice %124 {offsets = [0, 0], sizes = [16, 32], strides = [1, 1]} : vector<16x128xf32> to vector<16x32xf32>
    %126 = vector.extract_strided_slice %124 {offsets = [0, 32], sizes = [16, 32], strides = [1, 1]} : vector<16x128xf32> to vector<16x32xf32>
    %127 = vector.extract_strided_slice %124 {offsets = [0, 64], sizes = [16, 32], strides = [1, 1]} : vector<16x128xf32> to vector<16x32xf32>
    %128 = vector.extract_strided_slice %124 {offsets = [0, 96], sizes = [16, 32], strides = [1, 1]} : vector<16x128xf32> to vector<16x32xf32>
    %129 = arith.mulf %126, %111 : vector<16x32xf32>
    %130 = arith.mulf %125, %128 : vector<16x32xf32>
    %131 = arith.addf %129, %130 : vector<16x32xf32>
    %132 = math.tanh %131 : vector<16x32xf32>
    %133 = arith.mulf %127, %132 : vector<16x32xf32>
    %134 = vector.extract_strided_slice %7 {offsets = [96, 0], sizes = [16, 128], strides = [1, 1]} : vector<128x128xf32> to vector<16x128xf32>
    %135 = arith.truncf %133 : vector<16x32xf32> to vector<16x32xbf16>
    %cst_24 = arith.constant dense<0.000000e+00> : vector<16x128xf32>
    %136 = tpu.matmul %135, %8, %cst_24 {dimension_numbers = #tpu.dot_dimension_numbers<[1], [0], [0], [1], [0, 0, 1, 1], [], []>} : vector<16x32xbf16>, vector<32x128xbf16>, vector<16x128xf32> -> vector<16x128xf32>
    %137 = arith.addf %134, %136 : vector<16x128xf32>
    %138 = math.tanh %137 : vector<16x128xf32>
    %139 = arith.negf %137 : vector<16x128xf32>
    %140 = math.exp %139 : vector<16x128xf32>
    %cst_25 = arith.constant 1.000000e+00 : f32
    %141 = vector.broadcast %cst_25 : f32 to vector<16x128xf32>
    %142 = arith.addf %141, %140 : vector<16x128xf32>
    %143 = arith.divf %141, %142 : vector<16x128xf32>
    %144 = arith.select %11, %138, %143 : vector<16x128xi1>, vector<16x128xf32>
    %145 = vector.extract_strided_slice %144 {offsets = [0, 0], sizes = [16, 32], strides = [1, 1]} : vector<16x128xf32> to vector<16x32xf32>
    %146 = vector.extract_strided_slice %144 {offsets = [0, 32], sizes = [16, 32], strides = [1, 1]} : vector<16x128xf32> to vector<16x32xf32>
    %147 = vector.extract_strided_slice %144 {offsets = [0, 64], sizes = [16, 32], strides = [1, 1]} : vector<16x128xf32> to vector<16x32xf32>
    %148 = vector.extract_strided_slice %144 {offsets = [0, 96], sizes = [16, 32], strides = [1, 1]} : vector<16x128xf32> to vector<16x32xf32>
    %149 = arith.mulf %146, %131 : vector<16x32xf32>
    %150 = arith.mulf %145, %148 : vector<16x32xf32>
    %151 = arith.addf %149, %150 : vector<16x32xf32>
    %152 = math.tanh %151 : vector<16x32xf32>
    %153 = arith.mulf %147, %152 : vector<16x32xf32>
    %154 = vector.extract_strided_slice %7 {offsets = [112, 0], sizes = [16, 128], strides = [1, 1]} : vector<128x128xf32> to vector<16x128xf32>
    %155 = arith.truncf %153 : vector<16x32xf32> to vector<16x32xbf16>
    %cst_26 = arith.constant dense<0.000000e+00> : vector<16x128xf32>
    %156 = tpu.matmul %155, %8, %cst_26 {dimension_numbers = #tpu.dot_dimension_numbers<[1], [0], [0], [1], [0, 0, 1, 1], [], []>} : vector<16x32xbf16>, vector<32x128xbf16>, vector<16x128xf32> -> vector<16x128xf32>
    %157 = arith.addf %154, %156 : vector<16x128xf32>
    %158 = math.tanh %157 : vector<16x128xf32>
    %159 = arith.negf %157 : vector<16x128xf32>
    %160 = math.exp %159 : vector<16x128xf32>
    %cst_27 = arith.constant 1.000000e+00 : f32
    %161 = vector.broadcast %cst_27 : f32 to vector<16x128xf32>
    %162 = arith.addf %161, %160 : vector<16x128xf32>
    %163 = arith.divf %161, %162 : vector<16x128xf32>
    %164 = arith.select %11, %158, %163 : vector<16x128xi1>, vector<16x128xf32>
    %165 = vector.extract_strided_slice %164 {offsets = [0, 0], sizes = [16, 32], strides = [1, 1]} : vector<16x128xf32> to vector<16x32xf32>
    %166 = vector.extract_strided_slice %164 {offsets = [0, 32], sizes = [16, 32], strides = [1, 1]} : vector<16x128xf32> to vector<16x32xf32>
    %167 = vector.extract_strided_slice %164 {offsets = [0, 64], sizes = [16, 32], strides = [1, 1]} : vector<16x128xf32> to vector<16x32xf32>
    %168 = vector.extract_strided_slice %164 {offsets = [0, 96], sizes = [16, 32], strides = [1, 1]} : vector<16x128xf32> to vector<16x32xf32>
    %169 = arith.mulf %166, %151 : vector<16x32xf32>
    %170 = arith.mulf %165, %168 : vector<16x32xf32>
    %171 = arith.addf %169, %170 : vector<16x32xf32>
    %172 = math.tanh %171 : vector<16x32xf32>
    %173 = arith.mulf %167, %172 : vector<16x32xf32>
    %174 = tpu.concatenate %33, %53, %73, %93, %113, %133, %153, %173 in 1 : vector<16x32xf32>, vector<16x32xf32>, vector<16x32xf32>, vector<16x32xf32>, vector<16x32xf32>, vector<16x32xf32>, vector<16x32xf32>, vector<16x32xf32> -> vector<16x256xf32>
    %c0_28 = arith.constant 0 : index
    %c0_29 = arith.constant 0 : index
    %175 = vector.load %arg7[%c0_28, %c0_29] : memref<16x256xf32, #tpu.memory_space<vmem>>, vector<16x256xf32>
    tpu.vector_store %arg7[%c0_28, %c0_29], %174 {strides = array<i32>} : memref<16x256xf32, #tpu.memory_space<vmem>>, vector<16x256xf32>,
    %c0_30 = arith.constant 0 : index
    %c0_31 = arith.constant 0 : index
    %176 = vector.load %arg8[%c0_30, %c0_31] : memref<16x32xf32, #tpu.memory_space<vmem>>, vector<16x32xf32>
    tpu.vector_store %arg8[%c0_30, %c0_31], %173 {strides = array<i32>} : memref<16x32xf32, #tpu.memory_space<vmem>>, vector<16x32xf32>,
    return
  }
  func.func @transform_0(%arg0: i32) -> (i32, i32, i32) {
    %c0_i32 = arith.constant 0 : i32
    %c0_i32_0 = arith.constant 0 : i32
    %c0_i32_1 = arith.constant 0 : i32
    return %c0_i32, %arg0, %c0_i32_0 : i32, i32, i32
  }
  func.func @transform_1(%arg0: i32) -> (i32, i32) {
    %c0_i32 = arith.constant 0 : i32
    %c0_i32_0 = arith.constant 0 : i32
    %c0_i32_1 = arith.constant 0 : i32
    return %c0_i32, %c0_i32_0 : i32, i32
  }
  func.func @transform_2(%arg0: i32) -> (i32, i32) {
    %c0_i32 = arith.constant 0 : i32
    %c0_i32_0 = arith.constant 0 : i32
    %c0_i32_1 = arith.constant 0 : i32
    return %c0_i32, %c0_i32_0 : i32, i32
  }
  func.func @transform_3(%arg0: i32) -> (i32, i32) {
    %c0_i32 = arith.constant 0 : i32
    %c0_i32_0 = arith.constant 0 : i32
    %c0_i32_1 = arith.constant 0 : i32
    return %c0_i32, %c0_i32_0 : i32, i32
  }
  func.func @transform_4(%arg0: i32) -> (i32, i32) {
    %c0_i32 = arith.constant 0 : i32
    %c0_i32_0 = arith.constant 0 : i32
    return %arg0, %c0_i32 : i32, i32
  }
  func.func @transform_5(%arg0: i32) -> (i32, i32) {
    %c0_i32 = arith.constant 0 : i32
    %c0_i32_0 = arith.constant 0 : i32
    return %arg0, %c0_i32 : i32, i32
  }
  func.func @transform_6(%arg0: i32) -> (i32, i32) {
    %c0_i32 = arith.constant 0 : i32
    %c0_i32_0 = arith.constant 0 : i32
    return %arg0, %c0_i32 : i32, i32
  }
  func.func @transform_7(%arg0: i32) -> (i32, i32) {
    %c0_i32 = arith.constant 0 : i32
    %c0_i32_0 = arith.constant 0 : i32
    return %arg0, %c0_i32 : i32, i32
  }
}

</mosaic_0001>

<llo_original>
// kernel: rnn_encoder_forward.1
$region0: #{rnn_encoder_forward.1}
  #allocation0 [shape = 'u32[]', space=smem, size = 0x4, offset = 0x4, fixed_abs, tag = 'smem constant byte address 0x4 - core index']
  #allocation1 [shape = 'u32[144,128]{1,0:T(1,128)}', space=vmem, size = 0x12000, scoped, tag = 'internal scratch']
  %s0 = inlined_call_operand.vmem [shape: f32[8,16,16], index: 0, kind: input, shape index: {}]
  %s1 = inlined_call_operand.vmem [shape: bf16[16,128], index: 1, kind: input, shape index: {}]
  %s2 = inlined_call_operand.vmem [shape: f32[1,128], index: 2, kind: input, shape index: {}]
  %s3 = inlined_call_operand.vmem [shape: bf16[32,128], index: 3, kind: input, shape index: {}]
  %s4 = inlined_call_operand.vmem [shape: f32[16,32], index: 4, kind: input, shape index: {}]
  %s5 = inlined_call_operand.vmem [shape: f32[16,32], index: 5, kind: input, shape index: {}]
  %s6 = inlined_call_operand.vmem [shape: f32[16,256], index: 6, kind: output, shape index: {0}]
  %s7 = inlined_call_operand.hbm [shape: f32[16,32], index: 7, kind: output, shape index: {1}]
  %8 = xla_tuple %s6, %s7
  %s9 = sld [smem:[#allocation0]]
  $region42: #{rnn_encoder_forward.1} parent=0
    _
  %s11 = ssub.s32 1, %s9
  %s12 = scalar_select 0, %s11, %s9
  $region1: #{rnn_encoder_forward.1} parent=0
    #allocation2 [shape = 'u8[8192]{0}', space=vmem, size = 0x2000, scoped, tag = 'output window, operand 1, single buffered']
    #allocation3 [shape = 's32[1]{0}', space=sflag, size = 0x4, scoped, tag = 'scoped memory for rnn_encoder_forward.1']
    %13 = vsyncpa [#allocation3], 0
    // Predicated region
    $region2: #{rnn_encoder_forward.1} parent=1 // pred_check
      _
    $region3: #{rnn_encoder_forward.1} parent=1 // pred_check_branch
      %15 = sbr.rel (0) target = $region5
    $region4: #{rnn_encoder_forward.1} parent=1 // pred_region
      _
    $region5: #{rnn_encoder_forward.1} parent=1 // pred_fallthru
      _
    // Predicated region
    $region6: #{rnn_encoder_forward.1} parent=1 // pred_check
      _
    $region7: #{rnn_encoder_forward.1} parent=1 // pred_check_branch
      %17 = sbr.rel (0) target = $region9
    $region8: #{rnn_encoder_forward.1} parent=1 // pred_region
      _
    $region9: #{rnn_encoder_forward.1} parent=1 // pred_fallthru
      _
    // Predicated region
    $region10: #{rnn_encoder_forward.1} parent=1 // pred_check
      _
    $region11: #{rnn_encoder_forward.1} parent=1 // pred_check_branch
      %19 = sbr.rel (0) target = $region13
    $region12: #{rnn_encoder_forward.1} parent=1 // pred_region
      _
    $region13: #{rnn_encoder_forward.1} parent=1 // pred_fallthru
      _
    // Predicated region
    $region14: #{rnn_encoder_forward.1} parent=1 // pred_check
      _
    $region15: #{rnn_encoder_forward.1} parent=1 // pred_check_branch
      %21 = sbr.rel (0) target = $region17
    $region16: #{rnn_encoder_forward.1} parent=1 // pred_region
      _
    $region17: #{rnn_encoder_forward.1} parent=1 // pred_fallthru
      _
    // Predicated region
    $region18: #{rnn_encoder_forward.1} parent=1 // pred_check
      _
    $region19: #{rnn_encoder_forward.1} parent=1 // pred_check_branch
      %23 = sbr.rel (0) target = $region21
    $region20: #{rnn_encoder_forward.1} parent=1 // pred_region
      _
    $region21: #{rnn_encoder_forward.1} parent=1 // pred_fallthru
      _
    // Predicated region
    $region22: #{rnn_encoder_forward.1} parent=1 // pred_check
      _
    $region23: #{rnn_encoder_forward.1} parent=1 // pred_check_branch
      %25 = sbr.rel (0) target = $region25
    $region24: #{rnn_encoder_forward.1} parent=1 // pred_region
      _
    $region25: #{rnn_encoder_forward.1} parent=1 // pred_fallthru
      _
    %v27 = vld [vmem:[%s0] sm:$0xff]
    %v28 = vld [vmem:[%s0 + $0x8] sm:$0xff]
    %v29 = vld [vmem:[%s0 + $0x10] sm:$0xff]
    %v30 = vld [vmem:[%s0 + $0x18] sm:$0xff]
    %v31 = vld [vmem:[%s0 + $0x20] sm:$0xff]
    %v32 = vld [vmem:[%s0 + $0x28] sm:$0xff]
    %v33 = vld [vmem:[%s0 + $0x30] sm:$0xff]
    %v34 = vld [vmem:[%s0 + $0x38] sm:$0xff]
    %v35 = vld [vmem:[%s0 + $0x40] sm:$0xff]
    %v36 = vld [vmem:[%s0 + $0x48] sm:$0xff]
    %v37 = vld [vmem:[%s0 + $0x50] sm:$0xff]
    %v38 = vld [vmem:[%s0 + $0x58] sm:$0xff]
    %v39 = vld [vmem:[%s0 + $0x60] sm:$0xff]
    %v40 = vld [vmem:[%s0 + $0x68] sm:$0xff]
    %v41 = vld [vmem:[%s0 + $0x70] sm:$0xff]
    %v42 = vld [vmem:[%s0 + $0x78] sm:$0xff]
    %v43 = vpack.c.bf16 %v28, %v27
    %v44 = vpack.c.bf16 %v30, %v29
    %v45 = vpack.c.bf16 %v32, %v31
    %v46 = vpack.c.bf16 %v34, %v33
    %v47 = vpack.c.bf16 %v36, %v35
    %v48 = vpack.c.bf16 %v38, %v37
    %v49 = vpack.c.bf16 %v40, %v39
    %v50 = vpack.c.bf16 %v42, %v41
    %v51 = vld [vmem:[%s1] sm:$0xf]
    %v52 = vld [vmem:[%s1 + $0x4] sm:$0xf]
    %v53 = vld [vmem:[%s2] sm:$0x1]
    %v55 = vlaneseq
    %v56 = vshrl.u32 %v55, 7
    %v57 = vsub.s32 0, %v56
    %v58 = vrot.slane %v53, %v57
    %v62 = vunpack.c.l.b16 %v51
    %v63 = vunpack.c.l.b16 %v52
    %v64 = vpack.c.b16 %v63, %v62
    %vm66 = vcmask 130048
    %v68 = vsel %vm66, %v43, 0
    %v71 = vsel %vm66, %v44, 0
    %v74 = vsel %vm66, %v45, 0
    %v77 = vsel %vm66, %v46, 0
    %v80 = vsel %vm66, %v47, 0
    %v83 = vsel %vm66, %v48, 0
    %v86 = vsel %vm66, %v49, 0
    %v89 = vsel %vm66, %v50, 0
    %91 = vmatprep.subr.bf16.mxu0 0
    %92 = vmatpush1.bf16.msra.mxu0 %v64
    %93 = vmatprep.subr.bf16.mxu0 0
    %94 = vmatpush1.bf16.msra.mxu0 0
    %95 = vmatprep.subr.bf16.mxu0 0
    %96 = vmatpush1.bf16.msra.mxu0 0
    %97 = vmatprep.subr.bf16.mxu0 0
    %98 = vmatpush1.bf16.msra.mxu0 0
    %99 = vmatprep.subr.bf16.mxu0 0
    %100 = vmatpush1.bf16.msra.mxu0 0
    %101 = vmatprep.subr.bf16.mxu0 0
    %102 = vmatpush1.bf16.msra.mxu0 0
    %103 = vmatprep.subr.bf16.mxu0 0
    %104 = vmatpush1.bf16.msra.mxu0 0
    %105 = vmatprep.subr.bf16.mxu0 0
    %106 = vmatpush1.bf16.msra.mxu0 0
    %107 = vmatprep.subr.bf16.mxu0 0
    %108 = vmatpush1.bf16.msra.mxu0 0
    %109 = vmatprep.subr.bf16.mxu0 0
    %110 = vmatpush1.bf16.msra.mxu0 0
    %111 = vmatprep.subr.bf16.mxu0 0
    %112 = vmatpush1.bf16.msra.mxu0 0
    %113 = vmatprep.subr.bf16.mxu0 0
    %114 = vmatpush1.bf16.msra.mxu0 0
    %115 = vmatprep.subr.bf16.mxu0 0
    %116 = vmatpush1.bf16.msra.mxu0 0
    %117 = vmatprep.subr.bf16.mxu0 0
    %118 = vmatpush1.bf16.msra.mxu0 0
    %119 = vmatprep.subr.bf16.mxu0 0
    %120 = vmatpush1.bf16.msra.mxu0 0
    %121 = vmatprep.subr.bf16.mxu0 0
    %122 = vmatpush1.bf16.msra.mxu0 0
    %123 = vmatprep.mubr.bf16.mxu0 0
    %124 = vmatmul.mubr.bf16.gmra.mrb[0].mxu0 %v68
    %v125 = vpop.f32.mrb[0].mxu0
    %v126 = vadd.f32 %v58, %v125
    %v127 = vpop.f32.mrb[0].mxu0
    %v128 = vpop.f32.mrb[0].mxu0
    %v129 = vadd.f32 %v58, %v128
    %v130 = vpop.f32.mrb[0].mxu0
    %131 = vmatprep.mubr.bf16.mxu0 0
    %132 = vmatmul.mubr.bf16.gmra.mrb[0].mxu0 %v71
    %v133 = vpop.f32.mrb[0].mxu0
    %v134 = vadd.f32 %v58, %v133
    %v135 = vpop.f32.mrb[0].mxu0
    %v136 = vpop.f32.mrb[0].mxu0
    %v137 = vadd.f32 %v58, %v136
    %v138 = vpop.f32.mrb[0].mxu0
    %139 = vmatprep.mubr.bf16.mxu0 0
    %140 = vmatmul.mubr.bf16.gmra.mrb[0].mxu0 %v74
    %v141 = vpop.f32.mrb[0].mxu0
    %v142 = vadd.f32 %v58, %v141
    %v143 = vpop.f32.mrb[0].mxu0
    %v144 = vpop.f32.mrb[0].mxu0
    %v145 = vadd.f32 %v58, %v144
    %v146 = vpop.f32.mrb[0].mxu0
    %147 = vmatprep.mubr.bf16.mxu0 0
    %148 = vmatmul.mubr.bf16.gmra.mrb[0].mxu0 %v77
    %v149 = vpop.f32.mrb[0].mxu0
    %v150 = vadd.f32 %v58, %v149
    %v151 = vpop.f32.mrb[0].mxu0
    %v152 = vpop.f32.mrb[0].mxu0
    %v153 = vadd.f32 %v58, %v152
    %v154 = vpop.f32.mrb[0].mxu0
    %155 = vmatprep.mubr.bf16.mxu0 0
    %156 = vmatmul.mubr.bf16.gmra.mrb[0].mxu0 %v80
    %v157 = vpop.f32.mrb[0].mxu0
    %v158 = vadd.f32 %v58, %v157
    %v159 = vpop.f32.mrb[0].mxu0
    %v160 = vpop.f32.mrb[0].mxu0
    %v161 = vadd.f32 %v58, %v160
    %v162 = vpop.f32.mrb[0].mxu0
    %163 = vmatprep.mubr.bf16.mxu0 0
    %164 = vmatmul.mubr.bf16.gmra.mrb[0].mxu0 %v83
    %v165 = vpop.f32.mrb[0].mxu0
    %v166 = vadd.f32 %v58, %v165
    %v167 = vpop.f32.mrb[0].mxu0
    %v168 = vpop.f32.mrb[0].mxu0
    %v169 = vadd.f32 %v58, %v168
    %v170 = vpop.f32.mrb[0].mxu0
    %171 = vmatprep.mubr.bf16.mxu0 0
    %172 = vmatmul.mubr.bf16.gmra.mrb[0].mxu0 %v86
    %v173 = vpop.f32.mrb[0].mxu0
    %v174 = vadd.f32 %v58, %v173
    %v175 = vpop.f32.mrb[0].mxu0
    %v176 = vpop.f32.mrb[0].mxu0
    %v177 = vadd.f32 %v58, %v176
    %v178 = vpop.f32.mrb[0].mxu0
    %179 = vmatprep.mubr.bf16.mxu0 0
    %180 = vmatmul.mubr.bf16.gmra.mrb[0].mxu0 %v89
    %v181 = vpop.f32.mrb[0].mxu0
    %v182 = vadd.f32 %v58, %v181
    %v183 = vpop.f32.mrb[0].mxu0
    %v184 = vpop.f32.mrb[0].mxu0
    %v185 = vadd.f32 %v58, %v184
    %v186 = vpop.f32.mrb[0].mxu0
    %187 = vdwg.mxu0
    %v188 = vld [vmem:[%s3] sm:$0xf]
    %v189 = vld [vmem:[%s3 + $0x4] sm:$0xf]
    %v190 = vld [vmem:[%s3 + $0x8] sm:$0xf]
    %v191 = vld [vmem:[%s3 + $0xc] sm:$0xf]
    %v192 = vlaneseq
    %v193 = vand.u32 %v192, 127
    %vm194 = vcmp.ge.s32.totalorder %v193, 96
    %v195 = vld [vmem:[%s4] sm:$0xff]
    %v196 = vld [vmem:[%s4 + $0x8] sm:$0xff]
    %v197 = vld [vmem:[%s5] sm:$0xff]
    %v198 = vld [vmem:[%s5 + $0x8] sm:$0xff]
    %v199 = vpack.c.bf16 %v196, %v195
    %v204 = vunpack.c.l.b16 %v188
    %v205 = vunpack.c.l.b16 %v189
    %v206 = vunpack.c.l.b16 %v190
    %v207 = vunpack.c.l.b16 %v191
    %v208 = vpack.c.b16 %v205, %v204
    %v209 = vpack.c.b16 %v207, %v206
    %vm212 = vcmask 261120
    %v214 = vsel %vm212, %v199, 0
    %216 = vmatprep.subr.bf16.mxu0 0
    %217 = vmatpush1.bf16.msra.mxu0 %v208
    %218 = vmatprep.subr.bf16.mxu0 0
    %219 = vmatpush1.bf16.msra.mxu0 %v209
    %220 = vmatprep.subr.bf16.mxu0 0
    %221 = vmatpush1.bf16.msra.mxu0 0
    %222 = vmatprep.subr.bf16.mxu0 0
    %223 = vmatpush1.bf16.msra.mxu0 0
    %224 = vmatprep.subr.bf16.mxu0 0
    %225 = vmatpush1.bf16.msra.mxu0 0
    %226 = vmatprep.subr.bf16.mxu0 0
    %227 = vmatpush1.bf16.msra.mxu0 0
    %228 = vmatprep.subr.bf16.mxu0 0
    %229 = vmatpush1.bf16.msra.mxu0 0
    %230 = vmatprep.subr.bf16.mxu0 0
    %231 = vmatpush1.bf16.msra.mxu0 0
    %232 = vmatprep.subr.bf16.mxu0 0
    %233 = vmatpush1.bf16.msra.mxu0 0
    %234 = vmatprep.subr.bf16.mxu0 0
    %235 = vmatpush1.bf16.msra.mxu0 0
    %236 = vmatprep.subr.bf16.mxu0 0
    %237 = vmatpush1.bf16.msra.mxu0 0
    %238 = vmatprep.subr.bf16.mxu0 0
    %239 = vmatpush1.bf16.msra.mxu0 0
    %240 = vmatprep.subr.bf16.mxu0 0
    %241 = vmatpush1.bf16.msra.mxu0 0
    %242 = vmatprep.subr.bf16.mxu0 0
    %243 = vmatpush1.bf16.msra.mxu0 0
    %244 = vmatprep.subr.bf16.mxu0 0
    %245 = vmatpush1.bf16.msra.mxu0 0
    %246 = vmatprep.subr.bf16.mxu0 0
    %247 = vmatpush1.bf16.msra.mxu0 0
    %248 = vmatprep.mubr.bf16.mxu0 0
    %249 = vmatmul.mubr.bf16.gmra.mrb[0].mxu0 %v214
    %v250 = vpop.f32.mrb[0].mxu0
    %v251 = vadd.f32 0.0, %v250
    %v252 = vpop.f32.mrb[0].mxu0
    %v253 = vpop.f32.mrb[0].mxu0
    %v254 = vadd.f32 0.0, %v253
    %v255 = vpop.f32.mrb[0].mxu0
    %256 = vdwg.mxu0
    %v257 = vadd.f32 %v126, %v251
    %v258 = vadd.f32 %v129, %v254
    %v259 = vtanh.pop %v257
    %v260 = vtanh.pop %v258
    %v261 = vxor.u32 %v257, 2147483648
    %v262 = vxor.u32 %v258, 2147483648
    %v263 = vmul.f32 %v261, 1.442695
    %v264 = vpow.pop %v263
    %v265 = vmul.f32 %v262, 1.442695
    %v266 = vpow.pop %v265
    %v267 = vadd.f32 %v264, 1.0
    %v268 = vadd.f32 %v266, 1.0
    %v269 = vrcp.pop %v267
    %v270 = vmul.f32 1.0, %v269
    %v271 = vrcp.pop %v268
    %v272 = vmul.f32 1.0, %v271
    %v273 = vsel %vm194, %v259, %v270
    %v274 = vsel %vm194, %v260, %v272
    %277 = vrot.lane.b32.xlu0 %v197, 32
    %v278 = vpop.permute.xlu0 %277
    %279 = vrot.lane.b32.xlu0 %v198, 32
    %v280 = vpop.permute.xlu0 %279
    %v283 = vmul.f32 %v273, %v278
    %v284 = vmul.f32 %v274, %v280
    %287 = vrot.lane.b32.xlu0 %v273, 32
    %v288 = vpop.permute.xlu0 %287
    %289 = vrot.lane.b32.xlu0 %v274, 32
    %v290 = vpop.permute.xlu0 %289
    %v293 = vmul.f32 %v273, %v288
    %v294 = vmul.f32 %v274, %v290
    %297 = vrot.lane.b32.xlu0 %v293, 32
    %v298 = vpop.permute.xlu0 %297
    %299 = vrot.lane.b32.xlu0 %v294, 32
    %v300 = vpop.permute.xlu0 %299
    %v303 = vadd.f32 %v283, %v298
    %v304 = vadd.f32 %v284, %v300
    %v305 = vtanh.pop %v303
    %v306 = vtanh.pop %v304
    %309 = vrot.lane.b32.xlu0 %v305, 32
    %v310 = vpop.permute.xlu0 %309
    %311 = vrot.lane.b32.xlu0 %v306, 32
    %v312 = vpop.permute.xlu0 %311
    %v315 = vmul.f32 %v273, %v310
    %v316 = vmul.f32 %v274, %v312
    %v317 = vpack.c.bf16 %v316, %v315
    %319 = vrot.lane.b32.xlu0 %v317, 64
    %v320 = vpop.permute.xlu0 %319
    %v322 = vsel %vm212, %v320, 0
    %324 = vmatprep.subr.bf16.mxu0 0
    %325 = vmatpush1.bf16.msra.mxu0 %v208
    %326 = vmatprep.subr.bf16.mxu0 0
    %327 = vmatpush1.bf16.msra.mxu0 %v209
    %328 = vmatprep.subr.bf16.mxu0 0
    %329 = vmatpush1.bf16.msra.mxu0 0
    %330 = vmatprep.subr.bf16.mxu0 0
    %331 = vmatpush1.bf16.msra.mxu0 0
    %332 = vmatprep.subr.bf16.mxu0 0
    %333 = vmatpush1.bf16.msra.mxu0 0
    %334 = vmatprep.subr.bf16.mxu0 0
    %335 = vmatpush1.bf16.msra.mxu0 0
    %336 = vmatprep.subr.bf16.mxu0 0
    %337 = vmatpush1.bf16.msra.mxu0 0
    %338 = vmatprep.subr.bf16.mxu0 0
    %339 = vmatpush1.bf16.msra.mxu0 0
    %340 = vmatprep.subr.bf16.mxu0 0
    %341 = vmatpush1.bf16.msra.mxu0 0
    %342 = vmatprep.subr.bf16.mxu0 0
    %343 = vmatpush1.bf16.msra.mxu0 0
    %344 = vmatprep.subr.bf16.mxu0 0
    %345 = vmatpush1.bf16.msra.mxu0 0
    %346 = vmatprep.subr.bf16.mxu0 0
    %347 = vmatpush1.bf16.msra.mxu0 0
    %348 = vmatprep.subr.bf16.mxu0 0
    %349 = vmatpush1.bf16.msra.mxu0 0
    %350 = vmatprep.subr.bf16.mxu0 0
    %351 = vmatpush1.bf16.msra.mxu0 0
    %352 = vmatprep.subr.bf16.mxu0 0
    %353 = vmatpush1.bf16.msra.mxu0 0
    %354 = vmatprep.subr.bf16.mxu0 0
    %355 = vmatpush1.bf16.msra.mxu0 0
    %356 = vmatprep.mubr.bf16.mxu0 0
    %357 = vmatmul.mubr.bf16.gmra.mrb[0].mxu0 %v322
    %v358 = vpop.f32.mrb[0].mxu0
    %v359 = vadd.f32 0.0, %v358
    %v360 = vpop.f32.mrb[0].mxu0
    %v361 = vpop.f32.mrb[0].mxu0
    %v362 = vadd.f32 0.0, %v361
    %v363 = vpop.f32.mrb[0].mxu0
    %364 = vdwg.mxu0
    %v365 = vadd.f32 %v134, %v359
    %v366 = vadd.f32 %v137, %v362
    %v367 = vtanh.pop %v365
    %v368 = vtanh.pop %v366
    %v369 = vxor.u32 %v365, 2147483648
    %v370 = vxor.u32 %v366, 2147483648
    %v371 = vmul.f32 %v369, 1.442695
    %v372 = vpow.pop %v371
    %v373 = vmul.f32 %v370, 1.442695
    %v374 = vpow.pop %v373
    %v375 = vadd.f32 %v372, 1.0
    %v376 = vadd.f32 %v374, 1.0
    %v377 = vrcp.pop %v375
    %v378 = vmul.f32 1.0, %v377
    %v379 = vrcp.pop %v376
    %v380 = vmul.f32 1.0, %v379
    %v381 = vsel %vm194, %v367, %v378
    %v382 = vsel %vm194, %v368, %v380
    %v383 = vmul.f32 %v381, %v303
    %v384 = vmul.f32 %v382, %v304
    %387 = vrot.lane.b32.xlu0 %v381, 32
    %v388 = vpop.permute.xlu0 %387
    %389 = vrot.lane.b32.xlu0 %v382, 32
    %v390 = vpop.permute.xlu0 %389
    %v393 = vmul.f32 %v381, %v388
    %v394 = vmul.f32 %v382, %v390
    %397 = vrot.lane.b32.xlu0 %v393, 32
    %v398 = vpop.permute.xlu0 %397
    %399 = vrot.lane.b32.xlu0 %v394, 32
    %v400 = vpop.permute.xlu0 %399
    %v403 = vadd.f32 %v383, %v398
    %v404 = vadd.f32 %v384, %v400
    %v405 = vtanh.pop %v403
    %v406 = vtanh.pop %v404
    %409 = vrot.lane.b32.xlu0 %v405, 32
    %v410 = vpop.permute.xlu0 %409
    %411 = vrot.lane.b32.xlu0 %v406, 32
    %v412 = vpop.permute.xlu0 %411
    %v415 = vmul.f32 %v381, %v410
    %v416 = vmul.f32 %v382, %v412
    %v417 = vpack.c.bf16 %v416, %v415
    %419 = vrot.lane.b32.xlu0 %v417, 64
    %v420 = vpop.permute.xlu0 %419
    %v422 = vsel %vm212, %v420, 0
    %424 = vmatprep.subr.bf16.mxu0 0
    %425 = vmatpush1.bf16.msra.mxu0 %v208
    %426 = vmatprep.subr.bf16.mxu0 0
    %427 = vmatpush1.bf16.msra.mxu0 %v209
    %428 = vmatprep.subr.bf16.mxu0 0
    %429 = vmatpush1.bf16.msra.mxu0 0
    %430 = vmatprep.subr.bf16.mxu0 0
    %431 = vmatpush1.bf16.msra.mxu0 0
    %432 = vmatprep.subr.bf16.mxu0 0
    %433 = vmatpush1.bf16.msra.mxu0 0
    %434 = vmatprep.subr.bf16.mxu0 0
    %435 = vmatpush1.bf16.msra.mxu0 0
    %436 = vmatprep.subr.bf16.mxu0 0
    %437 = vmatpush1.bf16.msra.mxu0 0
    %438 = vmatprep.subr.bf16.mxu0 0
    %439 = vmatpush1.bf16.msra.mxu0 0
    %440 = vmatprep.subr.bf16.mxu0 0
    %441 = vmatpush1.bf16.msra.mxu0 0
    %442 = vmatprep.subr.bf16.mxu0 0
    %443 = vmatpush1.bf16.msra.mxu0 0
    %444 = vmatprep.subr.bf16.mxu0 0
    %445 = vmatpush1.bf16.msra.mxu0 0
    %446 = vmatprep.subr.bf16.mxu0 0
    %447 = vmatpush1.bf16.msra.mxu0 0
    %448 = vmatprep.subr.bf16.mxu0 0
    %449 = vmatpush1.bf16.msra.mxu0 0
    %450 = vmatprep.subr.bf16.mxu0 0
    %451 = vmatpush1.bf16.msra.mxu0 0
    %452 = vmatprep.subr.bf16.mxu0 0
    %453 = vmatpush1.bf16.msra.mxu0 0
    %454 = vmatprep.subr.bf16.mxu0 0
    %455 = vmatpush1.bf16.msra.mxu0 0
    %456 = vmatprep.mubr.bf16.mxu0 0
    %457 = vmatmul.mubr.bf16.gmra.mrb[0].mxu0 %v422
    %v458 = vpop.f32.mrb[0].mxu0
    %v459 = vadd.f32 0.0, %v458
    %v460 = vpop.f32.mrb[0].mxu0
    %v461 = vpop.f32.mrb[0].mxu0
    %v462 = vadd.f32 0.0, %v461
    %v463 = vpop.f32.mrb[0].mxu0
    %464 = vdwg.mxu0
    %v465 = vadd.f32 %v142, %v459
    %v466 = vadd.f32 %v145, %v462
    %v467 = vtanh.pop %v465
    %v468 = vtanh.pop %v466
    %v469 = vxor.u32 %v465, 2147483648
    %v470 = vxor.u32 %v466, 2147483648
    %v471 = vmul.f32 %v469, 1.442695
    %v472 = vpow.pop %v471
    %v473 = vmul.f32 %v470, 1.442695
    %v474 = vpow.pop %v473
    %v475 = vadd.f32 %v472, 1.0
    %v476 = vadd.f32 %v474, 1.0
    %v477 = vrcp.pop %v475
    %v478 = vmul.f32 1.0, %v477
    %v479 = vrcp.pop %v476
    %v480 = vmul.f32 1.0, %v479
    %v481 = vsel %vm194, %v467, %v478
    %v482 = vsel %vm194, %v468, %v480
    %v483 = vmul.f32 %v481, %v403
    %v484 = vmul.f32 %v482, %v404
    %487 = vrot.lane.b32.xlu0 %v481, 32
    %v488 = vpop.permute.xlu0 %487
    %489 = vrot.lane.b32.xlu0 %v482, 32
    %v490 = vpop.permute.xlu0 %489
    %v493 = vmul.f32 %v481, %v488
    %v494 = vmul.f32 %v482, %v490
    %497 = vrot.lane.b32.xlu0 %v493, 32
    %v498 = vpop.permute.xlu0 %497
    %499 = vrot.lane.b32.xlu0 %v494, 32
    %v500 = vpop.permute.xlu0 %499
    %v503 = vadd.f32 %v483, %v498
    %v504 = vadd.f32 %v484, %v500
    %v505 = vtanh.pop %v503
    %v506 = vtanh.pop %v504
    %509 = vrot.lane.b32.xlu0 %v505, 32
    %v510 = vpop.permute.xlu0 %509
    %511 = vrot.lane.b32.xlu0 %v506, 32
    %v512 = vpop.permute.xlu0 %511
    %v515 = vmul.f32 %v481, %v510
    %v516 = vmul.f32 %v482, %v512
    %v517 = vpack.c.bf16 %v516, %v515
    %519 = vrot.lane.b32.xlu0 %v517, 64
    %v520 = vpop.permute.xlu0 %519
    %v522 = vsel %vm212, %v520, 0
    %524 = vmatprep.subr.bf16.mxu0 0
    %525 = vmatpush1.bf16.msra.mxu0 %v208
    %526 = vmatprep.subr.bf16.mxu0 0
    %527 = vmatpush1.bf16.msra.mxu0 %v209
    %528 = vmatprep.subr.bf16.mxu0 0
    %529 = vmatpush1.bf16.msra.mxu0 0
    %530 = vmatprep.subr.bf16.mxu0 0
    %531 = vmatpush1.bf16.msra.mxu0 0
    %532 = vmatprep.subr.bf16.mxu0 0
    %533 = vmatpush1.bf16.msra.mxu0 0
    %534 = vmatprep.subr.bf16.mxu0 0
    %535 = vmatpush1.bf16.msra.mxu0 0
    %536 = vmatprep.subr.bf16.mxu0 0
    %537 = vmatpush1.bf16.msra.mxu0 0
    %538 = vmatprep.subr.bf16.mxu0 0
    %539 = vmatpush1.bf16.msra.mxu0 0
    %540 = vmatprep.subr.bf16.mxu0 0
    %541 = vmatpush1.bf16.msra.mxu0 0
    %542 = vmatprep.subr.bf16.mxu0 0
    %543 = vmatpush1.bf16.msra.mxu0 0
    %544 = vmatprep.subr.bf16.mxu0 0
    %545 = vmatpush1.bf16.msra.mxu0 0
    %546 = vmatprep.subr.bf16.mxu0 0
    %547 = vmatpush1.bf16.msra.mxu0 0
    %548 = vmatprep.subr.bf16.mxu0 0
    %549 = vmatpush1.bf16.msra.mxu0 0
    %550 = vmatprep.subr.bf16.mxu0 0
    %551 = vmatpush1.bf16.msra.mxu0 0
    %552 = vmatprep.subr.bf16.mxu0 0
    %553 = vmatpush1.bf16.msra.mxu0 0
    %554 = vmatprep.subr.bf16.mxu0 0
    %555 = vmatpush1.bf16.msra.mxu0 0
    %556 = vmatprep.mubr.bf16.mxu0 0
    %557 = vmatmul.mubr.bf16.gmra.mrb[0].mxu0 %v522
    %v558 = vpop.f32.mrb[0].mxu0
    %v559 = vadd.f32 0.0, %v558
    %v560 = vpop.f32.mrb[0].mxu0
    %v561 = vpop.f32.mrb[0].mxu0
    %v562 = vadd.f32 0.0, %v561
    %v563 = vpop.f32.mrb[0].mxu0
    %564 = vdwg.mxu0
    %v565 = vadd.f32 %v150, %v559
    %v566 = vadd.f32 %v153, %v562
    %v567 = vtanh.pop %v565
    %v568 = vtanh.pop %v566
    %v569 = vxor.u32 %v565, 2147483648
    %v570 = vxor.u32 %v566, 2147483648
    %v571 = vmul.f32 %v569, 1.442695
    %v572 = vpow.pop %v571
    %v573 = vmul.f32 %v570, 1.442695
    %v574 = vpow.pop %v573
    %v575 = vadd.f32 %v572, 1.0
    %v576 = vadd.f32 %v574, 1.0
    %v577 = vrcp.pop %v575
    %v578 = vmul.f32 1.0, %v577
    %v579 = vrcp.pop %v576
    %v580 = vmul.f32 1.0, %v579
    %v581 = vsel %vm194, %v567, %v578
    %v582 = vsel %vm194, %v568, %v580
    %v583 = vmul.f32 %v581, %v503
    %v584 = vmul.f32 %v582, %v504
    %587 = vrot.lane.b32.xlu0 %v581, 32
    %v588 = vpop.permute.xlu0 %587
    %589 = vrot.lane.b32.xlu0 %v582, 32
    %v590 = vpop.permute.xlu0 %589
    %v593 = vmul.f32 %v581, %v588
    %v594 = vmul.f32 %v582, %v590
    %597 = vrot.lane.b32.xlu0 %v593, 32
    %v598 = vpop.permute.xlu0 %597
    %599 = vrot.lane.b32.xlu0 %v594, 32
    %v600 = vpop.permute.xlu0 %599
    %v603 = vadd.f32 %v583, %v598
    %v604 = vadd.f32 %v584, %v600
    %v605 = vtanh.pop %v603
    %v606 = vtanh.pop %v604
    %609 = vrot.lane.b32.xlu0 %v605, 32
    %v610 = vpop.permute.xlu0 %609
    %611 = vrot.lane.b32.xlu0 %v606, 32
    %v612 = vpop.permute.xlu0 %611
    %v615 = vmul.f32 %v581, %v610
    %v616 = vmul.f32 %v582, %v612
    %v617 = vpack.c.bf16 %v616, %v615
    %619 = vrot.lane.b32.xlu0 %v617, 64
    %v620 = vpop.permute.xlu0 %619
    %v622 = vsel %vm212, %v620, 0
    %624 = vmatprep.subr.bf16.mxu0 0
    %625 = vmatpush1.bf16.msra.mxu0 %v208
    %626 = vmatprep.subr.bf16.mxu0 0
    %627 = vmatpush1.bf16.msra.mxu0 %v209
    %628 = vmatprep.subr.bf16.mxu0 0
    %629 = vmatpush1.bf16.msra.mxu0 0
    %630 = vmatprep.subr.bf16.mxu0 0
    %631 = vmatpush1.bf16.msra.mxu0 0
    %632 = vmatprep.subr.bf16.mxu0 0
    %633 = vmatpush1.bf16.msra.mxu0 0
    %634 = vmatprep.subr.bf16.mxu0 0
    %635 = vmatpush1.bf16.msra.mxu0 0
    %636 = vmatprep.subr.bf16.mxu0 0
    %637 = vmatpush1.bf16.msra.mxu0 0
    %638 = vmatprep.subr.bf16.mxu0 0
    %639 = vmatpush1.bf16.msra.mxu0 0
    %640 = vmatprep.subr.bf16.mxu0 0
    %641 = vmatpush1.bf16.msra.mxu0 0
    %642 = vmatprep.subr.bf16.mxu0 0
    %643 = vmatpush1.bf16.msra.mxu0 0
    %644 = vmatprep.subr.bf16.mxu0 0
    %645 = vmatpush1.bf16.msra.mxu0 0
    %646 = vmatprep.subr.bf16.mxu0 0
    %647 = vmatpush1.bf16.msra.mxu0 0
    %648 = vmatprep.subr.bf16.mxu0 0
    %649 = vmatpush1.bf16.msra.mxu0 0
    %650 = vmatprep.subr.bf16.mxu0 0
    %651 = vmatpush1.bf16.msra.mxu0 0
    %652 = vmatprep.subr.bf16.mxu0 0
    %653 = vmatpush1.bf16.msra.mxu0 0
    %654 = vmatprep.subr.bf16.mxu0 0
    %655 = vmatpush1.bf16.msra.mxu0 0
    %656 = vmatprep.mubr.bf16.mxu0 0
    %657 = vmatmul.mubr.bf16.gmra.mrb[0].mxu0 %v622
    %v658 = vpop.f32.mrb[0].mxu0
    %v659 = vadd.f32 0.0, %v658
    %v660 = vpop.f32.mrb[0].mxu0
    %v661 = vpop.f32.mrb[0].mxu0
    %v662 = vadd.f32 0.0, %v661
    %v663 = vpop.f32.mrb[0].mxu0
    %664 = vdwg.mxu0
    %v665 = vadd.f32 %v158, %v659
    %v666 = vadd.f32 %v161, %v662
    %v667 = vtanh.pop %v665
    %v668 = vtanh.pop %v666
    %v669 = vxor.u32 %v665, 2147483648
    %v670 = vxor.u32 %v666, 2147483648
    %v671 = vmul.f32 %v669, 1.442695
    %v672 = vpow.pop %v671
    %v673 = vmul.f32 %v670, 1.442695
    %v674 = vpow.pop %v673
    %v675 = vadd.f32 %v672, 1.0
    %v676 = vadd.f32 %v674, 1.0
    %v677 = vrcp.pop %v675
    %v678 = vmul.f32 1.0, %v677
    %v679 = vrcp.pop %v676
    %v680 = vmul.f32 1.0, %v679
    %v681 = vsel %vm194, %v667, %v678
    %v682 = vsel %vm194, %v668, %v680
    %v683 = vmul.f32 %v681, %v603
    %v684 = vmul.f32 %v682, %v604
    %687 = vrot.lane.b32.xlu0 %v681, 32
    %v688 = vpop.permute.xlu0 %687
    %689 = vrot.lane.b32.xlu0 %v682, 32
    %v690 = vpop.permute.xlu0 %689
    %v693 = vmul.f32 %v681, %v688
    %v694 = vmul.f32 %v682, %v690
    %697 = vrot.lane.b32.xlu0 %v693, 32
    %v698 = vpop.permute.xlu0 %697
    %699 = vrot.lane.b32.xlu0 %v694, 32
    %v700 = vpop.permute.xlu0 %699
    %v703 = vadd.f32 %v683, %v698
    %v704 = vadd.f32 %v684, %v700
    %v705 = vtanh.pop %v703
    %v706 = vtanh.pop %v704
    %709 = vrot.lane.b32.xlu0 %v705, 32
    %v710 = vpop.permute.xlu0 %709
    %711 = vrot.lane.b32.xlu0 %v706, 32
    %v712 = vpop.permute.xlu0 %711
    %v715 = vmul.f32 %v681, %v710
    %v716 = vmul.f32 %v682, %v712
    %v717 = vpack.c.bf16 %v716, %v715
    %719 = vrot.lane.b32.xlu0 %v717, 64
    %v720 = vpop.permute.xlu0 %719
    %v722 = vsel %vm212, %v720, 0
    %724 = vmatprep.subr.bf16.mxu0 0
    %725 = vmatpush1.bf16.msra.mxu0 %v208
    %726 = vmatprep.subr.bf16.mxu0 0
    %727 = vmatpush1.bf16.msra.mxu0 %v209
    %728 = vmatprep.subr.bf16.mxu0 0
    %729 = vmatpush1.bf16.msra.mxu0 0
    %730 = vmatprep.subr.bf16.mxu0 0
    %731 = vmatpush1.bf16.msra.mxu0 0
    %732 = vmatprep.subr.bf16.mxu0 0
    %733 = vmatpush1.bf16.msra.mxu0 0
    %734 = vmatprep.subr.bf16.mxu0 0
    %735 = vmatpush1.bf16.msra.mxu0 0
    %736 = vmatprep.subr.bf16.mxu0 0
    %737 = vmatpush1.bf16.msra.mxu0 0
    %738 = vmatprep.subr.bf16.mxu0 0
    %739 = vmatpush1.bf16.msra.mxu0 0
    %740 = vmatprep.subr.bf16.mxu0 0
    %741 = vmatpush1.bf16.msra.mxu0 0
    %742 = vmatprep.subr.bf16.mxu0 0
    %743 = vmatpush1.bf16.msra.mxu0 0
    %744 = vmatprep.subr.bf16.mxu0 0
    %745 = vmatpush1.bf16.msra.mxu0 0
    %746 = vmatprep.subr.bf16.mxu0 0
    %747 = vmatpush1.bf16.msra.mxu0 0
    %748 = vmatprep.subr.bf16.mxu0 0
    %749 = vmatpush1.bf16.msra.mxu0 0
    %750 = vmatprep.subr.bf16.mxu0 0
    %751 = vmatpush1.bf16.msra.mxu0 0
    %752 = vmatprep.subr.bf16.mxu0 0
    %753 = vmatpush1.bf16.msra.mxu0 0
    %754 = vmatprep.subr.bf16.mxu0 0
    %755 = vmatpush1.bf16.msra.mxu0 0
    %756 = vmatprep.mubr.bf16.mxu0 0
    %757 = vmatmul.mubr.bf16.gmra.mrb[0].mxu0 %v722
    %v758 = vpop.f32.mrb[0].mxu0
    %v759 = vadd.f32 0.0, %v758
    %v760 = vpop.f32.mrb[0].mxu0
    %v761 = vpop.f32.mrb[0].mxu0
    %v762 = vadd.f32 0.0, %v761
    %v763 = vpop.f32.mrb[0].mxu0
    %764 = vdwg.mxu0
    %v765 = vadd.f32 %v166, %v759
    %v766 = vadd.f32 %v169, %v762
    %v767 = vtanh.pop %v765
    %v768 = vtanh.pop %v766
    %v769 = vxor.u32 %v765, 2147483648
    %v770 = vxor.u32 %v766, 2147483648
    %v771 = vmul.f32 %v769, 1.442695
    %v772 = vpow.pop %v771
    %v773 = vmul.f32 %v770, 1.442695
    %v774 = vpow.pop %v773
    %v775 = vadd.f32 %v772, 1.0
    %v776 = vadd.f32 %v774, 1.0
    %v777 = vrcp.pop %v775
    %v778 = vmul.f32 1.0, %v777
    %v779 = vrcp.pop %v776
    %v780 = vmul.f32 1.0, %v779
    %v781 = vsel %vm194, %v767, %v778
    %v782 = vsel %vm194, %v768, %v780
    %v783 = vmul.f32 %v781, %v703
    %v784 = vmul.f32 %v782, %v704
    %787 = vrot.lane.b32.xlu0 %v781, 32
    %v788 = vpop.permute.xlu0 %787
    %789 = vrot.lane.b32.xlu0 %v782, 32
    %v790 = vpop.permute.xlu0 %789
    %v793 = vmul.f32 %v781, %v788
    %v794 = vmul.f32 %v782, %v790
    %797 = vrot.lane.b32.xlu0 %v793, 32
    %v798 = vpop.permute.xlu0 %797
    %799 = vrot.lane.b32.xlu0 %v794, 32
    %v800 = vpop.permute.xlu0 %799
    %v803 = vadd.f32 %v783, %v798
    %v804 = vadd.f32 %v784, %v800
    %v805 = vtanh.pop %v803
    %v806 = vtanh.pop %v804
    %809 = vrot.lane.b32.xlu0 %v805, 32
    %v810 = vpop.permute.xlu0 %809
    %811 = vrot.lane.b32.xlu0 %v806, 32
    %v812 = vpop.permute.xlu0 %811
    %v815 = vmul.f32 %v781, %v810
    %v816 = vmul.f32 %v782, %v812
    %v817 = vpack.c.bf16 %v816, %v815
    %819 = vrot.lane.b32.xlu0 %v817, 64
    %v820 = vpop.permute.xlu0 %819
    %v822 = vsel %vm212, %v820, 0
    %824 = vmatprep.subr.bf16.mxu0 0
    %825 = vmatpush1.bf16.msra.mxu0 %v208
    %826 = vmatprep.subr.bf16.mxu0 0
    %827 = vmatpush1.bf16.msra.mxu0 %v209
    %828 = vmatprep.subr.bf16.mxu0 0
    %829 = vmatpush1.bf16.msra.mxu0 0
    %830 = vmatprep.subr.bf16.mxu0 0
    %831 = vmatpush1.bf16.msra.mxu0 0
    %832 = vmatprep.subr.bf16.mxu0 0
    %833 = vmatpush1.bf16.msra.mxu0 0
    %834 = vmatprep.subr.bf16.mxu0 0
    %835 = vmatpush1.bf16.msra.mxu0 0
    %836 = vmatprep.subr.bf16.mxu0 0
    %837 = vmatpush1.bf16.msra.mxu0 0
    %838 = vmatprep.subr.bf16.mxu0 0
    %839 = vmatpush1.bf16.msra.mxu0 0
    %840 = vmatprep.subr.bf16.mxu0 0
    %841 = vmatpush1.bf16.msra.mxu0 0
    %842 = vmatprep.subr.bf16.mxu0 0
    %843 = vmatpush1.bf16.msra.mxu0 0
    %844 = vmatprep.subr.bf16.mxu0 0
    %845 = vmatpush1.bf16.msra.mxu0 0
    %846 = vmatprep.subr.bf16.mxu0 0
    %847 = vmatpush1.bf16.msra.mxu0 0
    %848 = vmatprep.subr.bf16.mxu0 0
    %849 = vmatpush1.bf16.msra.mxu0 0
    %850 = vmatprep.subr.bf16.mxu0 0
    %851 = vmatpush1.bf16.msra.mxu0 0
    %852 = vmatprep.subr.bf16.mxu0 0
    %853 = vmatpush1.bf16.msra.mxu0 0
    %854 = vmatprep.subr.bf16.mxu0 0
    %855 = vmatpush1.bf16.msra.mxu0 0
    %856 = vmatprep.mubr.bf16.mxu0 0
    %857 = vmatmul.mubr.bf16.gmra.mrb[0].mxu0 %v822
    %v858 = vpop.f32.mrb[0].mxu0
    %v859 = vadd.f32 0.0, %v858
    %v860 = vpop.f32.mrb[0].mxu0
    %v861 = vpop.f32.mrb[0].mxu0
    %v862 = vadd.f32 0.0, %v861
    %v863 = vpop.f32.mrb[0].mxu0
    %864 = vdwg.mxu0
    %v865 = vadd.f32 %v174, %v859
    %v866 = vadd.f32 %v177, %v862
    %v867 = vtanh.pop %v865
    %v868 = vtanh.pop %v866
    %v869 = vxor.u32 %v865, 2147483648
    %v870 = vxor.u32 %v866, 2147483648
    %v871 = vmul.f32 %v869, 1.442695
    %v872 = vpow.pop %v871
    %v873 = vmul.f32 %v870, 1.442695
    %v874 = vpow.pop %v873
    %v875 = vadd.f32 %v872, 1.0
    %v876 = vadd.f32 %v874, 1.0
    %v877 = vrcp.pop %v875
    %v878 = vmul.f32 1.0, %v877
    %v879 = vrcp.pop %v876
    %v880 = vmul.f32 1.0, %v879
    %v881 = vsel %vm194, %v867, %v878
    %v882 = vsel %vm194, %v868, %v880
    %v883 = vmul.f32 %v881, %v803
    %v884 = vmul.f32 %v882, %v804
    %887 = vrot.lane.b32.xlu0 %v881, 32
    %v888 = vpop.permute.xlu0 %887
    %889 = vrot.lane.b32.xlu0 %v882, 32
    %v890 = vpop.permute.xlu0 %889
    %v893 = vmul.f32 %v881, %v888
    %v894 = vmul.f32 %v882, %v890
    %897 = vrot.lane.b32.xlu0 %v893, 32
    %v898 = vpop.permute.xlu0 %897
    %899 = vrot.lane.b32.xlu0 %v894, 32
    %v900 = vpop.permute.xlu0 %899
    %v903 = vadd.f32 %v883, %v898
    %v904 = vadd.f32 %v884, %v900
    %v905 = vtanh.pop %v903
    %v906 = vtanh.pop %v904
    %909 = vrot.lane.b32.xlu0 %v905, 32
    %v910 = vpop.permute.xlu0 %909
    %911 = vrot.lane.b32.xlu0 %v906, 32
    %v912 = vpop.permute.xlu0 %911
    %v915 = vmul.f32 %v881, %v910
    %v916 = vmul.f32 %v882, %v912
    %v917 = vpack.c.bf16 %v916, %v915
    %919 = vrot.lane.b32.xlu0 %v917, 64
    %v920 = vpop.permute.xlu0 %919
    %v922 = vsel %vm212, %v920, 0
    %924 = vmatprep.subr.bf16.mxu0 0
    %925 = vmatpush1.bf16.msra.mxu0 %v208
    %926 = vmatprep.subr.bf16.mxu0 0
    %927 = vmatpush1.bf16.msra.mxu0 %v209
    %928 = vmatprep.subr.bf16.mxu0 0
    %929 = vmatpush1.bf16.msra.mxu0 0
    %930 = vmatprep.subr.bf16.mxu0 0
    %931 = vmatpush1.bf16.msra.mxu0 0
    %932 = vmatprep.subr.bf16.mxu0 0
    %933 = vmatpush1.bf16.msra.mxu0 0
    %934 = vmatprep.subr.bf16.mxu0 0
    %935 = vmatpush1.bf16.msra.mxu0 0
    %936 = vmatprep.subr.bf16.mxu0 0
    %937 = vmatpush1.bf16.msra.mxu0 0
    %938 = vmatprep.subr.bf16.mxu0 0
    %939 = vmatpush1.bf16.msra.mxu0 0
    %940 = vmatprep.subr.bf16.mxu0 0
    %941 = vmatpush1.bf16.msra.mxu0 0
    %942 = vmatprep.subr.bf16.mxu0 0
    %943 = vmatpush1.bf16.msra.mxu0 0
    %944 = vmatprep.subr.bf16.mxu0 0
    %945 = vmatpush1.bf16.msra.mxu0 0
    %946 = vmatprep.subr.bf16.mxu0 0
    %947 = vmatpush1.bf16.msra.mxu0 0
    %948 = vmatprep.subr.bf16.mxu0 0
    %949 = vmatpush1.bf16.msra.mxu0 0
    %950 = vmatprep.subr.bf16.mxu0 0
    %951 = vmatpush1.bf16.msra.mxu0 0
    %952 = vmatprep.subr.bf16.mxu0 0
    %953 = vmatpush1.bf16.msra.mxu0 0
    %954 = vmatprep.subr.bf16.mxu0 0
    %955 = vmatpush1.bf16.msra.mxu0 0
    %956 = vmatprep.mubr.bf16.mxu0 0
    %957 = vmatmul.mubr.bf16.gmra.mrb[0].mxu0 %v922
    %v958 = vpop.f32.mrb[0].mxu0
    %v959 = vadd.f32 0.0, %v958
    %v960 = vpop.f32.mrb[0].mxu0
    %v961 = vpop.f32.mrb[0].mxu0
    %v962 = vadd.f32 0.0, %v961
    %v963 = vpop.f32.mrb[0].mxu0
    %964 = vdwg.mxu0
    %v965 = vadd.f32 %v182, %v959
    %v966 = vadd.f32 %v185, %v962
    %v967 = vtanh.pop %v965
    %v968 = vtanh.pop %v966
    %v969 = vxor.u32 %v965, 2147483648
    %v970 = vxor.u32 %v966, 2147483648
    %v971 = vmul.f32 %v969, 1.442695
    %v972 = vpow.pop %v971
    %v973 = vmul.f32 %v970, 1.442695
    %v974 = vpow.pop %v973
    %v975 = vadd.f32 %v972, 1.0
    %v976 = vadd.f32 %v974, 1.0
    %v977 = vrcp.pop %v975
    %v978 = vmul.f32 1.0, %v977
    %v979 = vrcp.pop %v976
    %v980 = vmul.f32 1.0, %v979
    %v981 = vsel %vm194, %v967, %v978
    %v982 = vsel %vm194, %v968, %v980
    %v983 = vmul.f32 %v981, %v903
    %v984 = vmul.f32 %v982, %v904
    %987 = vrot.lane.b32.xlu0 %v981, 32
    %v988 = vpop.permute.xlu0 %987
    %989 = vrot.lane.b32.xlu0 %v982, 32
    %v990 = vpop.permute.xlu0 %989
    %v993 = vmul.f32 %v981, %v988
    %v994 = vmul.f32 %v982, %v990
    %997 = vrot.lane.b32.xlu0 %v993, 32
    %v998 = vpop.permute.xlu0 %997
    %999 = vrot.lane.b32.xlu0 %v994, 32
    %v1000 = vpop.permute.xlu0 %999
    %v1003 = vadd.f32 %v983, %v998
    %v1004 = vadd.f32 %v984, %v1000
    %v1005 = vtanh.pop %v1003
    %v1006 = vtanh.pop %v1004
    %1009 = vrot.lane.b32.xlu0 %v1005, 32
    %v1010 = vpop.permute.xlu0 %1009
    %1011 = vrot.lane.b32.xlu0 %v1006, 32
    %v1012 = vpop.permute.xlu0 %1011
    %v1015 = vmul.f32 %v981, %v1010
    %v1016 = vmul.f32 %v982, %v1012
    %1019 = vrot.lane.b32.xlu0 %v315, 64
    %v1020 = vpop.permute.xlu0 %1019
    %1021 = vrot.lane.b32.xlu0 %v316, 64
    %v1022 = vpop.permute.xlu0 %1021
    %1027 = vrot.lane.b32.xlu0 %v415, 96
    %v1028 = vpop.permute.xlu0 %1027
    %1029 = vrot.lane.b32.xlu0 %v416, 96
    %v1030 = vpop.permute.xlu0 %1029
    %1035 = vrot.lane.b32.xlu0 %v615, 32
    %v1036 = vpop.permute.xlu0 %1035
    %1037 = vrot.lane.b32.xlu0 %v616, 32
    %v1038 = vpop.permute.xlu0 %1037
    %1043 = vrot.lane.b32.xlu0 %v715, 64
    %v1044 = vpop.permute.xlu0 %1043
    %1045 = vrot.lane.b32.xlu0 %v716, 64
    %v1046 = vpop.permute.xlu0 %1045
    %1051 = vrot.lane.b32.xlu0 %v815, 96
    %v1052 = vpop.permute.xlu0 %1051
    %1053 = vrot.lane.b32.xlu0 %v816, 96
    %v1054 = vpop.permute.xlu0 %1053
    %1059 = vrot.lane.b32.xlu0 %v1015, 32
    %v1060 = vpop.permute.xlu0 %1059
    %1061 = vrot.lane.b32.xlu0 %v1016, 32
    %v1062 = vpop.permute.xlu0 %1061
    %v1065 = vsel %vm212, %v1020, %v1028
    %v1066 = vsel %vm212, %v1022, %v1030
    %vm1067 = vcmask 523264
    %v1068 = vsel %vm1067, %v1065, %v515
    %v1069 = vsel %vm1067, %v1066, %v516
    %vm1070 = vcmask 785408
    %v1071 = vsel %vm1070, %v1068, %v1036
    %v1072 = vsel %vm1070, %v1069, %v1038
    %v1073 = vsel %vm212, %v1044, %v1052
    %v1074 = vsel %vm212, %v1046, %v1054
    %v1075 = vsel %vm1067, %v1073, %v915
    %v1076 = vsel %vm1067, %v1074, %v916
    %v1077 = vsel %vm1070, %v1075, %v1060
    %v1078 = vsel %vm1070, %v1076, %v1062
    %1079 = vst [vmem:[%s6] sm:$0xff] %v1071
    %1080 = vst [vmem:[%s6 + $0x8] sm:$0xff] %v1077
    %1081 = vst [vmem:[%s6 + $0x10] sm:$0xff] %v1072
    %1082 = vst [vmem:[%s6 + $0x18] sm:$0xff] %v1078
    %1083 = vrot.lane.b32.xlu0 %v1015, 64
    %v1084 = vpop.permute.xlu0 %1083
    %1085 = vrot.lane.b32.xlu0 %v1016, 64
    %v1086 = vpop.permute.xlu0 %1085
    %1089 = vst.msk [vmem:[#allocation2] sm:$0xff] %vm212, %v1084
    %1090 = vst.msk [vmem:[#allocation2 + $0x8] sm:$0xff] %vm212, %v1086
    // Predicated region
    $region26: #{rnn_encoder_forward.1} parent=1 // pred_check
      _
    $region27: #{rnn_encoder_forward.1} parent=1 // pred_check_branch
      %1092 = sbr.rel (0) target = $region29
    $region28: #{rnn_encoder_forward.1} parent=1 // pred_region
      _
    $region29: #{rnn_encoder_forward.1} parent=1 // pred_fallthru
      _
    // Predicated region
    $region30: #{rnn_encoder_forward.1} parent=1 // pred_check
      _
    $region31: #{rnn_encoder_forward.1} parent=1 // pred_check_branch
      %1094 = sbr.rel (0) target = $region33
    $region32: #{rnn_encoder_forward.1} parent=1 // pred_region
      %s1096 = ssub.s32 256, 256
      %1097 = vsyncadd [#allocation3], %s1096
      %s1098 = sshll.u32 [#allocation2], 4
      %s1099 = int_to_ptr.vmem [resolvable:$true] %s1098
      %1104 = dma.vmem_to_hbm [thread:$0]  %s1099, 256, %s7, [#allocation3], 128, 128, 8
    $region33: #{rnn_encoder_forward.1} parent=1 // pred_fallthru
      _
    // Predicated region
    $region34: #{rnn_encoder_forward.1} parent=1 // pred_check
      _
    $region35: #{rnn_encoder_forward.1} parent=1 // pred_check_branch
      %1106 = sbr.rel (0) target = $region37
    $region36: #{rnn_encoder_forward.1} parent=1 // pred_region
      _
    $region37: #{rnn_encoder_forward.1} parent=1 // pred_fallthru
      _
    // Predicated region
    $region38: #{rnn_encoder_forward.1} parent=1 // pred_check
      _
    $region39: #{rnn_encoder_forward.1} parent=1 // pred_check_branch
      %1108 = sbr.rel (0) target = $region41
    $region40: #{rnn_encoder_forward.1} parent=1 // pred_region
      %1109 = dma.done [#allocation3], 256
    $region41: #{rnn_encoder_forward.1} parent=1 // pred_fallthru
      _
    %1110 = vsyncpa [#allocation3], 1

</llo_original>
